<compile_context>
chip_gen: v7x
topology: tpu7x:2x2x1
jax: 0.10.0
libtpu: 0.0.40
codegen_flags: <defaults>
</compile_context>

<pallas_src>
import jax
import jax.numpy as jnp
import numpy as np
from jax import lax
from jax.experimental import pallas as pl
from jax.experimental.pallas import tpu as pltpu

NUM_JOINTS = 24
NUM_BETAS = 10
POSE_LOSS_WEIGHT = 1.0
BETA_LOSS_WEIGHT = 0.001

LANES = 128
MAX_BLOCK_ROWS = 1024   # 1024 rows * 128 lanes * 13 ch * 4 B * 2 bufs ~= 13.6 MiB
PACK_DTYPE = jnp.float32


def _smpl_loss_kernel(packed_ref, mask_bj_ref, pred_betas_ref, gt_betas_ref,
                      mask_b_ref, out_ref, pose_acc_ref):
    step = pl.program_id(0)
    last = pl.num_programs(0) - 1

    # ---- init the VMEM pose accumulator once --------------------------------
    @pl.when(step == 0)
    def _():
        pose_acc_ref[...] = jnp.zeros_like(pose_acc_ref)

    # ---- batch_rodrigues on this block: axis-angle -> quat -> rotmat --------
    tx = packed_ref[9].astype(jnp.float32)                        # (bR, 128)
    ty = packed_ref[10].astype(jnp.float32)
    tz = packed_ref[11].astype(jnp.float32)
    ex = tx + 1e-8
    ey = ty + 1e-8
    ez = tz + 1e-8
    sumsq = ex * ex + ey * ey + ez * ez
    inv_angle = lax.rsqrt(sumsq)                  # 1 / ||theta + 1e-8||
    half = (sumsq * inv_angle) * 0.5              # 0.5 * ||theta + 1e-8||
    w = jnp.cos(half)
    s = jnp.sin(half) * inv_angle
    x = s * tx
    y = s * ty
    z = s * tz
    # NOTE: quaternion is unit by construction (cos^2 + sin^2*|t|^2/|t+eps|^2);
    # the explicit re-normalization of the PyTorch reference only differs at
    # rounding level, so it is dropped to save a rsqrt + 4 muls.
    ww, xx, yy, zz = w * w, x * x, y * y, z * z
    tw, tx2, ty2 = w + w, x + x, y + y            # pre-doubled factors
    wx2, wy2, wz2 = tw * x, tw * y, tw * z        # 2wx, 2wy, 2wz
    xy2, xz2, yz2 = tx2 * y, tx2 * z, ty2 * z     # 2xy, 2xz, 2yz
    da = ww + xx
    db_ = yy + zz
    dc = ww - xx
    dd = yy - zz

    gt_entries = (
        lambda: da - db_,          # r00 = w2+x2-y2-z2
        lambda: xy2 - wz2,         # r01
        lambda: wy2 + xz2,         # r02
        lambda: wz2 + xy2,         # r10
        lambda: dc + dd,           # r11 = w2-x2+y2-z2
        lambda: yz2 - wx2,         # r12
        lambda: xz2 - wy2,         # r20
        lambda: wx2 + yz2,         # r21
        lambda: dc - dd,           # r22 = w2-x2-y2+z2
    )

    # ---- per-entry fused squared error into 3 partial accumulators ----------
    sq = [None, None, None]
    for k in range(9):
        diff = packed_ref[k].astype(jnp.float32) - gt_entries[k]()
        term = diff * diff
        j = k % 3
        sq[j] = term if sq[j] is None else sq[j] + term

    mask = mask_bj_ref[...].astype(jnp.float32)
    pose_acc_ref[...] = pose_acc_ref[...] + mask * ((sq[0] + sq[1]) + sq[2])

    # ---- finalize: single cross-lane reduce + betas loss + weights ----------
    @pl.when(step == last)
    def _():
        pose_sum = jnp.sum(pose_acc_ref[...])
        mask_b = mask_b_ref[...].astype(jnp.float32)               # (1, B)
        dbeta = (pred_betas_ref[...].astype(jnp.float32)
                 - gt_betas_ref[...].astype(jnp.float32))          # (10, B)
        beta_sum = jnp.sum((mask_b * dbeta) * dbeta)
        count = jnp.sum(mask_b)
        safe = jnp.maximum(count, 1.0)
        pose_mse = jnp.where(count > 0.5,
                             pose_sum / (safe * float(NUM_JOINTS * 9)), 0.0)
        betas_mse = jnp.where(count > 0.5,
                              beta_sum / (safe * float(NUM_BETAS)), 0.0)
        out_ref[0, 0] = pose_mse * POSE_LOSS_WEIGHT
        out_ref[0, 1] = betas_mse * BETA_LOSS_WEIGHT


@jax.jit
def smpl_loss(pred_rotmat, gt_pose, pred_betas, gt_betas, has_smpl, valid):
    """pred_rotmat: (B,24,3,3)  gt_pose: (B,72)  betas: (B,10)  has_smpl/valid: (B,)"""
    B = pred_rotmat.shape[0]
    BJ = B * NUM_JOINTS

    # Row-block tiling over the flattened (batch*joint) axis.
    rows = (BJ + LANES - 1) // LANES
    rows8 = ((rows + 7) // 8) * 8                     # sublane multiple of 8
    if rows8 <= MAX_BLOCK_ROWS:
        block_rows = rows8
        rows_pad = rows8
    else:
        block_rows = MAX_BLOCK_ROWS
        rows_pad = ((rows + block_rows - 1) // block_rows) * block_rows
    num_blocks = rows_pad // block_rows
    flat_pad = rows_pad * LANES

    # ONE pack: 12 channels (9 pred rotmat + 3 gt axis-angle), lane-dense.
    # With allow_input_fusion XLA fuses concat/pad/transpose into the operand.
    pred_flat = pred_rotmat.reshape(BJ, 9)            # contiguous reshape
    gt_flat = gt_pose.reshape(BJ, 3)                  # contiguous reshape
    chans = jnp.concatenate([pred_flat, gt_flat], axis=1).astype(PACK_DTYPE)
    chans = jnp.pad(chans, ((0, flat_pad - BJ), (0, 0)))
    packed = chans.T.reshape(12, rows_pad, LANES)

    # Per-(batch, joint) validity mask, zero on the padded tail.
    mask_b = ((valid == 1) & (has_smpl == 1)).astype(PACK_DTYPE)       # (B,)
    mask_bj = jnp.pad(jnp.repeat(mask_b, NUM_JOINTS), (0, flat_pad - BJ))
    mask_bj = mask_bj.reshape(rows_pad, LANES)

    # Betas & per-sample mask lane-dense on the batch axis.
    pred_betas_t = pred_betas.T                       # (10, B)
    gt_betas_t = gt_betas.T                           # (10, B)
    mask_b_row = mask_b.reshape(1, B).astype(jnp.float32)

    bytes_per = jnp.dtype(PACK_DTYPE).itemsize
    vmem_limit_bytes = min(
        2 * (12 + 1) * block_rows * LANES * bytes_per   # double-buffered inputs
        + block_rows * LANES * 4                        # pose accumulator scratch
        + (8 << 20),                                    # betas/mask/internal headroom
        64 << 20)                                       # v7x physical VMEM budget

    out = pl.pallas_call(
        _smpl_loss_kernel,
        out_shape=jax.ShapeDtypeStruct((1, 2), jnp.float32),
        grid=(num_blocks,),
        in_specs=[
            pl.BlockSpec((12, block_rows, LANES), lambda i: (0, i, 0)),
            pl.BlockSpec((block_rows, LANES), lambda i: (i, 0)),
            pl.BlockSpec((NUM_BETAS, B), lambda i: (0, 0)),
            pl.BlockSpec((NUM_BETAS, B), lambda i: (0, 0)),
            pl.BlockSpec((1, B), lambda i: (0, 0)),
        ],
        out_specs=pl.BlockSpec((1, 2), lambda i: (0, 0),
                               memory_space=pltpu.MemorySpace.SMEM),
        scratch_shapes=[pltpu.VMEM((block_rows, LANES), jnp.float32)],
        compiler_params=pltpu.CompilerParams(
            dimension_semantics=("arbitrary",),
            allow_input_fusion=[True, True, True, True, True],
            vmem_limit_bytes=int(vmem_limit_bytes)),
    )(packed, mask_bj, pred_betas_t, gt_betas_t, mask_b_row)

    return {"pose_Loss": out[0, 0], "shape_Loss": out[0, 1]}


def _reference_numpy(pred_rotmat, gt_pose, pred_betas, gt_betas, has_smpl, valid):
    """Pure-numpy replica of the PyTorch forward (for a correctness check)."""
    pred_rotmat = np.asarray(pred_rotmat, np.float32)
    gt_pose = np.asarray(gt_pose, np.float32)
    pred_betas = np.asarray(pred_betas, np.float32)
    gt_betas = np.asarray(gt_betas, np.float32)
    mask = (np.asarray(valid) == 1) & (np.asarray(has_smpl) == 1)

    theta = gt_pose.reshape(-1, 3)
    l1 = np.linalg.norm(theta + 1e-8, axis=1, keepdims=True)
    normalized = theta / l1
    half = l1 * 0.5
    quat = np.concatenate([np.cos(half), np.sin(half) * normalized], axis=1)
    quat = quat / np.linalg.norm(quat, axis=1, keepdims=True)
    w, x, y, z = quat[:, 0], quat[:, 1], quat[:, 2], quat[:, 3]
    w2, x2, y2, z2 = w * w, x * x, y * y, z * z
    wx, wy, wz = w * x, w * y, w * z
    xy, xz, yz = x * y, x * z, y * z
    rot = np.stack([w2 + x2 - y2 - z2, 2 * xy - 2 * wz, 2 * wy + 2 * xz,
                    2 * wz + 2 * xy, w2 - x2 + y2 - z2, 2 * yz - 2 * wx,
                    2 * xz - 2 * wy, 2 * wx + 2 * yz, w2 - x2 - y2 + z2],
                   axis=1).reshape(-1, NUM_JOINTS, 3, 3)

    if mask.sum() > 0:
        pose = np.mean((pred_rotmat[mask] - rot[mask]) ** 2)
        shape = np.mean((pred_betas[mask] - gt_betas[mask]) ** 2)
    else:
        pose = 0.0
        shape = 0.0
    return pose * POSE_LOSS_WEIGHT, shape * BETA_LOSS_WEIGHT


if __name__ == "__main__":
    B = 8
    key = jax.random.PRNGKey(0)
    k1, k2, k3, k4 = jax.random.split(key, 4)

    pred_rotmat = jax.random.normal(k1, (B, NUM_JOINTS, 3, 3), jnp.float32)
    gt_pose = 0.5 * jax.random.normal(k2, (B, NUM_JOINTS * 3), jnp.float32)
    pred_betas = jax.random.normal(k3, (B, NUM_BETAS), jnp.float32)
    gt_betas = jax.random.normal(k4, (B, NUM_BETAS), jnp.float32)
    valid = jnp.array([1, 1, 0, 1, 1, 0, 1, 1], jnp.int32)
    has_smpl = jnp.array([1, 0, 1, 1, 1, 1, 0, 1], jnp.int32)

    out = smpl_loss(pred_rotmat, gt_pose, pred_betas, gt_betas, has_smpl, valid)
    jax.block_until_ready(out)

    ref_pose, ref_shape = _reference_numpy(pred_rotmat, gt_pose, pred_betas,
                                           gt_betas, has_smpl, valid)
    assert np.allclose(float(out["pose_Loss"]), ref_pose, rtol=1e-3, atol=1e-5), \
        (float(out["pose_Loss"]), ref_pose)
    assert np.allclose(float(out["shape_Loss"]), ref_shape, rtol=1e-3, atol=1e-6), \
        (float(out["shape_Loss"]), ref_shape)

    print("KERNEL_OK")
</pallas_src>

<mosaic_0001>
module attributes {stable_mosaic.version = 11 : i64} {
  func.func @_smpl_loss_kernel(%arg0: i32, %arg1: memref<12x8x128xf32, #tpu.memory_space<vmem>>, %arg2: memref<8x128xf32, #tpu.memory_space<vmem>>, %arg3: memref<10x8xf32, #tpu.memory_space<vmem>>, %arg4: memref<10x8xf32, #tpu.memory_space<vmem>>, %arg5: memref<1x8xf32, #tpu.memory_space<vmem>>, %arg6: memref<1x2xf32, #tpu.memory_space<smem>>, %arg7: memref<8x128xf32, #tpu.memory_space<vmem>>) attributes {dimension_semantics = [#tpu.dimension_semantics<arbitrary>], iteration_bounds = array<i64: 1>, scalar_prefetch = 0 : i64, scratch_operands = 1 : i64, tpu.core_type = #tpu.core_type<tc>, window_params = [{transform_indices = @transform_0, window_bounds = array<i64: 12, 8, 128>}, {transform_indices = @transform_1, window_bounds = array<i64: 8, 128>}, {pipeline_mode = #tpu.pipeline_mode<synchronous>, transform_indices = @transform_2, window_bounds = array<i64: 10, 8>}, {pipeline_mode = #tpu.pipeline_mode<synchronous>, transform_indices = @transform_3, window_bounds = array<i64: 10, 8>}, {pipeline_mode = #tpu.pipeline_mode<synchronous>, transform_indices = @transform_4, window_bounds = array<i64: 1, 8>}, {transform_indices = @transform_5, window_bounds = array<i64: 1, 2>}]} {
    %c0_i32 = arith.constant 0 : i32
    %0 = arith.cmpi eq, %arg0, %c0_i32 : i32
    %1 = arith.extui %0 : i1 to i32
    %c0_i32_0 = arith.constant 0 : i32
    %2 = arith.cmpi ne, %1, %c0_i32_0 : i32
    scf.if %2 {
      %cst_36 = arith.constant 0.000000e+00 : f32
      %108 = vector.broadcast %cst_36 : f32 to vector<8x128xf32>
      %c0_37 = arith.constant 0 : index
      %c0_38 = arith.constant 0 : index
      %109 = vector.load %arg7[%c0_37, %c0_38] : memref<8x128xf32, #tpu.memory_space<vmem>>, vector<8x128xf32>
      tpu.vector_store %arg7[%c0_37, %c0_38], %108 {strides = array<i32>} : memref<8x128xf32, #tpu.memory_space<vmem>>, vector<8x128xf32>,
    } else {
    }
    %c9 = arith.constant 9 : index
    %c0 = arith.constant 0 : index
    %c0_1 = arith.constant 0 : index
    %3 = vector.load %arg1[%c9, %c0, %c0_1] : memref<12x8x128xf32, #tpu.memory_space<vmem>>, vector<1x8x128xf32>
    %4 = vector.shape_cast %3 : vector<1x8x128xf32> to vector<8x128xf32>
    %c10 = arith.constant 10 : index
    %c0_2 = arith.constant 0 : index
    %c0_3 = arith.constant 0 : index
    %5 = vector.load %arg1[%c10, %c0_2, %c0_3] : memref<12x8x128xf32, #tpu.memory_space<vmem>>, vector<1x8x128xf32>
    %6 = vector.shape_cast %5 : vector<1x8x128xf32> to vector<8x128xf32>
    %c11 = arith.constant 11 : index
    %c0_4 = arith.constant 0 : index
    %c0_5 = arith.constant 0 : index
    %7 = vector.load %arg1[%c11, %c0_4, %c0_5] : memref<12x8x128xf32, #tpu.memory_space<vmem>>, vector<1x8x128xf32>
    %8 = vector.shape_cast %7 : vector<1x8x128xf32> to vector<8x128xf32>
    %cst = arith.constant 9.99999993E-9 : f32
    %9 = vector.broadcast %cst : f32 to vector<8x128xf32>
    %10 = arith.addf %4, %9 : vector<8x128xf32>
    %cst_6 = arith.constant 9.99999993E-9 : f32
    %11 = vector.broadcast %cst_6 : f32 to vector<8x128xf32>
    %12 = arith.addf %6, %11 : vector<8x128xf32>
    %cst_7 = arith.constant 9.99999993E-9 : f32
    %13 = vector.broadcast %cst_7 : f32 to vector<8x128xf32>
    %14 = arith.addf %8, %13 : vector<8x128xf32>
    %15 = arith.mulf %10, %10 : vector<8x128xf32>
    %16 = arith.mulf %12, %12 : vector<8x128xf32>
    %17 = arith.addf %15, %16 : vector<8x128xf32>
    %18 = arith.mulf %14, %14 : vector<8x128xf32>
    %19 = arith.addf %17, %18 : vector<8x128xf32>
    %20 = math.rsqrt %19 : vector<8x128xf32>
    %21 = arith.mulf %19, %20 : vector<8x128xf32>
    %cst_8 = arith.constant 5.000000e-01 : f32
    %22 = vector.broadcast %cst_8 : f32 to vector<8x128xf32>
    %23 = arith.mulf %21, %22 : vector<8x128xf32>
    %24 = math.cos %23 : vector<8x128xf32>
    %25 = math.sin %23 : vector<8x128xf32>
    %26 = arith.mulf %25, %20 : vector<8x128xf32>
    %27 = arith.mulf %26, %4 : vector<8x128xf32>
    %28 = arith.mulf %26, %6 : vector<8x128xf32>
    %29 = arith.mulf %26, %8 : vector<8x128xf32>
    %30 = arith.mulf %24, %24 : vector<8x128xf32>
    %31 = arith.mulf %27, %27 : vector<8x128xf32>
    %32 = arith.mulf %28, %28 : vector<8x128xf32>
    %33 = arith.mulf %29, %29 : vector<8x128xf32>
    %34 = arith.addf %24, %24 : vector<8x128xf32>
    %35 = arith.addf %27, %27 : vector<8x128xf32>
    %36 = arith.addf %28, %28 : vector<8x128xf32>
    %37 = arith.mulf %34, %27 : vector<8x128xf32>
    %38 = arith.mulf %34, %28 : vector<8x128xf32>
    %39 = arith.mulf %34, %29 : vector<8x128xf32>
    %40 = arith.mulf %35, %28 : vector<8x128xf32>
    %41 = arith.mulf %35, %29 : vector<8x128xf32>
    %42 = arith.mulf %36, %29 : vector<8x128xf32>
    %43 = arith.addf %30, %31 : vector<8x128xf32>
    %44 = arith.addf %32, %33 : vector<8x128xf32>
    %45 = arith.subf %30, %31 : vector<8x128xf32>
    %46 = arith.subf %32, %33 : vector<8x128xf32>
    %c0_9 = arith.constant 0 : index
    %c0_10 = arith.constant 0 : index
    %c0_11 = arith.constant 0 : index
    %47 = vector.load %arg1[%c0_9, %c0_10, %c0_11] : memref<12x8x128xf32, #tpu.memory_space<vmem>>, vector<1x8x128xf32>
    %48 = vector.shape_cast %47 : vector<1x8x128xf32> to vector<8x128xf32>
    %49 = arith.subf %43, %44 : vector<8x128xf32>
    %50 = arith.subf %48, %49 : vector<8x128xf32>
    %51 = arith.mulf %50, %50 : vector<8x128xf32>
    %c1 = arith.constant 1 : index
    %c0_12 = arith.constant 0 : index
    %c0_13 = arith.constant 0 : index
    %52 = vector.load %arg1[%c1, %c0_12, %c0_13] : memref<12x8x128xf32, #tpu.memory_space<vmem>>, vector<1x8x128xf32>
    %53 = vector.shape_cast %52 : vector<1x8x128xf32> to vector<8x128xf32>
    %54 = arith.subf %40, %39 : vector<8x128xf32>
    %55 = arith.subf %53, %54 : vector<8x128xf32>
    %56 = arith.mulf %55, %55 : vector<8x128xf32>
    %c2 = arith.constant 2 : index
    %c0_14 = arith.constant 0 : index
    %c0_15 = arith.constant 0 : index
    %57 = vector.load %arg1[%c2, %c0_14, %c0_15] : memref<12x8x128xf32, #tpu.memory_space<vmem>>, vector<1x8x128xf32>
    %58 = vector.shape_cast %57 : vector<1x8x128xf32> to vector<8x128xf32>
    %59 = arith.addf %38, %41 : vector<8x128xf32>
    %60 = arith.subf %58, %59 : vector<8x128xf32>
    %61 = arith.mulf %60, %60 : vector<8x128xf32>
    %c3 = arith.constant 3 : index
    %c0_16 = arith.constant 0 : index
    %c0_17 = arith.constant 0 : index
    %62 = vector.load %arg1[%c3, %c0_16, %c0_17] : memref<12x8x128xf32, #tpu.memory_space<vmem>>, vector<1x8x128xf32>
    %63 = vector.shape_cast %62 : vector<1x8x128xf32> to vector<8x128xf32>
    %64 = arith.addf %39, %40 : vector<8x128xf32>
    %65 = arith.subf %63, %64 : vector<8x128xf32>
    %66 = arith.mulf %65, %65 : vector<8x128xf32>
    %67 = arith.addf %51, %66 : vector<8x128xf32>
    %c4 = arith.constant 4 : index
    %c0_18 = arith.constant 0 : index
    %c0_19 = arith.constant 0 : index
    %68 = vector.load %arg1[%c4, %c0_18, %c0_19] : memref<12x8x128xf32, #tpu.memory_space<vmem>>, vector<1x8x128xf32>
    %69 = vector.shape_cast %68 : vector<1x8x128xf32> to vector<8x128xf32>
    %70 = arith.addf %45, %46 : vector<8x128xf32>
    %71 = arith.subf %69, %70 : vector<8x128xf32>
    %72 = arith.mulf %71, %71 : vector<8x128xf32>
    %73 = arith.addf %56, %72 : vector<8x128xf32>
    %c5 = arith.constant 5 : index
    %c0_20 = arith.constant 0 : index
    %c0_21 = arith.constant 0 : index
    %74 = vector.load %arg1[%c5, %c0_20, %c0_21] : memref<12x8x128xf32, #tpu.memory_space<vmem>>, vector<1x8x128xf32>
    %75 = vector.shape_cast %74 : vector<1x8x128xf32> to vector<8x128xf32>
    %76 = arith.subf %42, %37 : vector<8x128xf32>
    %77 = arith.subf %75, %76 : vector<8x128xf32>
    %78 = arith.mulf %77, %77 : vector<8x128xf32>
    %79 = arith.addf %61, %78 : vector<8x128xf32>
    %c6 = arith.constant 6 : index
    %c0_22 = arith.constant 0 : index
    %c0_23 = arith.constant 0 : index
    %80 = vector.load %arg1[%c6, %c0_22, %c0_23] : memref<12x8x128xf32, #tpu.memory_space<vmem>>, vector<1x8x128xf32>
    %81 = vector.shape_cast %80 : vector<1x8x128xf32> to vector<8x128xf32>
    %82 = arith.subf %41, %38 : vector<8x128xf32>
    %83 = arith.subf %81, %82 : vector<8x128xf32>
    %84 = arith.mulf %83, %83 : vector<8x128xf32>
    %85 = arith.addf %67, %84 : vector<8x128xf32>
    %c7 = arith.constant 7 : index
    %c0_24 = arith.constant 0 : index
    %c0_25 = arith.constant 0 : index
    %86 = vector.load %arg1[%c7, %c0_24, %c0_25] : memref<12x8x128xf32, #tpu.memory_space<vmem>>, vector<1x8x128xf32>
    %87 = vector.shape_cast %86 : vector<1x8x128xf32> to vector<8x128xf32>
    %88 = arith.addf %37, %42 : vector<8x128xf32>
    %89 = arith.subf %87, %88 : vector<8x128xf32>
    %90 = arith.mulf %89, %89 : vector<8x128xf32>
    %91 = arith.addf %73, %90 : vector<8x128xf32>
    %c8 = arith.constant 8 : index
    %c0_26 = arith.constant 0 : index
    %c0_27 = arith.constant 0 : index
    %92 = vector.load %arg1[%c8, %c0_26, %c0_27] : memref<12x8x128xf32, #tpu.memory_space<vmem>>, vector<1x8x128xf32>
    %93 = vector.shape_cast %92 : vector<1x8x128xf32> to vector<8x128xf32>
    %94 = arith.subf %45, %46 : vector<8x128xf32>
    %95 = arith.subf %93, %94 : vector<8x128xf32>
    %96 = arith.mulf %95, %95 : vector<8x128xf32>
    %97 = arith.addf %79, %96 : vector<8x128xf32>
    %c0_28 = arith.constant 0 : index
    %c0_29 = arith.constant 0 : index
    %98 = vector.load %arg2[%c0_28, %c0_29] : memref<8x128xf32, #tpu.memory_space<vmem>>, vector<8x128xf32>
    %c0_30 = arith.constant 0 : index
    %c0_31 = arith.constant 0 : index
    %99 = vector.load %arg7[%c0_30, %c0_31] : memref<8x128xf32, #tpu.memory_space<vmem>>, vector<8x128xf32>
    %100 = arith.addf %85, %91 : vector<8x128xf32>
    %101 = arith.addf %100, %97 : vector<8x128xf32>
    %102 = arith.mulf %98, %101 : vector<8x128xf32>
    %103 = arith.addf %99, %102 : vector<8x128xf32>
    %c0_32 = arith.constant 0 : index
    %c0_33 = arith.constant 0 : index
    %104 = vector.load %arg7[%c0_32, %c0_33] : memref<8x128xf32, #tpu.memory_space<vmem>>, vector<8x128xf32>
    tpu.vector_store %arg7[%c0_32, %c0_33], %103 {strides = array<i32>} : memref<8x128xf32, #tpu.memory_space<vmem>>, vector<8x128xf32>,
    %c0_i32_34 = arith.constant 0 : i32
    %105 = arith.cmpi eq, %arg0, %c0_i32_34 : i32
    %106 = arith.extui %105 : i1 to i32
    %c0_i32_35 = arith.constant 0 : i32
    %107 = arith.cmpi ne, %106, %c0_i32_35 : i32
    scf.if %107 {
      %c0_36 = arith.constant 0 : index
      %c0_37 = arith.constant 0 : index
      %108 = vector.load %arg7[%c0_36, %c0_37] : memref<8x128xf32, #tpu.memory_space<vmem>>, vector<8x128xf32>
      %109 = vector.shape_cast %108 : vector<8x128xf32> to vector<1x8x128xf32>
      %cst_38 = arith.constant dense<0.000000e+00> : vector<1xf32>
      %110 = vector.multi_reduction <add>, %109, %cst_38 [1, 2] : vector<1x8x128xf32> to vector<1xf32>
      %111 = vector.shape_cast %110 : vector<1xf32> to vector<1x1x1xf32>
      %112 = vector.extract %111[0, 0, 0] : f32 from vector<1x1x1xf32>
      %c0_39 = arith.constant 0 : index
      %c0_40 = arith.constant 0 : index
      %113 = vector.load %arg5[%c0_39, %c0_40] : memref<1x8xf32, #tpu.memory_space<vmem>>, vector<1x8xf32>
      %c0_41 = arith.constant 0 : index
      %c0_42 = arith.constant 0 : index
      %114 = vector.load %arg3[%c0_41, %c0_42] : memref<10x8xf32, #tpu.memory_space<vmem>>, vector<10x8xf32>
      %c0_43 = arith.constant 0 : index
      %c0_44 = arith.constant 0 : index
      %115 = vector.load %arg4[%c0_43, %c0_44] : memref<10x8xf32, #tpu.memory_space<vmem>>, vector<10x8xf32>
      %116 = arith.subf %114, %115 : vector<10x8xf32>
      %117 = vector.broadcast %113 : vector<1x8xf32> to vector<10x8xf32>
      %118 = arith.mulf %117, %116 : vector<10x8xf32>
      %119 = arith.mulf %118, %116 : vector<10x8xf32>
      %120 = vector.shape_cast %119 : vector<10x8xf32> to vector<1x10x8xf32>
      %cst_45 = arith.constant dense<0.000000e+00> : vector<1xf32>
      %121 = vector.multi_reduction <add>, %120, %cst_45 [1, 2] : vector<1x10x8xf32> to vector<1xf32>
      %122 = vector.shape_cast %121 : vector<1xf32> to vector<1x1x1xf32>
      %123 = vector.extract %122[0, 0, 0] : f32 from vector<1x1x1xf32>
      %124 = vector.shape_cast %113 : vector<1x8xf32> to vector<1x1x8xf32>
      %cst_46 = arith.constant dense<0.000000e+00> : vector<1xf32>
      %125 = vector.multi_reduction <add>, %124, %cst_46 [1, 2] : vector<1x1x8xf32> to vector<1xf32>
      %126 = vector.shape_cast %125 : vector<1xf32> to vector<1x1x1xf32>
      %127 = vector.extract %126[0, 0, 0] : f32 from vector<1x1x1xf32>
      %cst_47 = arith.constant 1.000000e+00 : f32
      %128 = arith.maximumf %127, %cst_47 : f32
      %cst_48 = arith.constant 5.000000e-01 : f32
      %129 = arith.cmpf ogt, %127, %cst_48 : f32
      %cst_49 = arith.constant 2.160000e+02 : f32
      %130 = arith.mulf %128, %cst_49 : f32
      %131 = arith.divf %112, %130 : f32
      %cst_50 = arith.constant 0.000000e+00 : f32
      %132 = arith.select %129, %131, %cst_50 : f32
      %cst_51 = arith.constant 5.000000e-01 : f32
      %133 = arith.cmpf ogt, %127, %cst_51 : f32
      %cst_52 = arith.constant 1.000000e+01 : f32
      %134 = arith.mulf %128, %cst_52 : f32
      %135 = arith.divf %123, %134 : f32
      %cst_53 = arith.constant 0.000000e+00 : f32
      %136 = arith.select %133, %135, %cst_53 : f32
      %cst_54 = arith.constant 1.000000e+00 : f32
      %137 = arith.mulf %132, %cst_54 : f32
      %c0_55 = arith.constant 0 : index
      %c0_56 = arith.constant 0 : index
      %138 = memref.load %arg6[%c0_55, %c0_56] : memref<1x2xf32, #tpu.memory_space<smem>>
      memref.store %137, %arg6[%c0_55, %c0_56] : memref<1x2xf32, #tpu.memory_space<smem>>
      %cst_57 = arith.constant 1.000000e-03 : f32
      %139 = arith.mulf %136, %cst_57 : f32
      %c0_58 = arith.constant 0 : index
      %c1_59 = arith.constant 1 : index
      %140 = memref.load %arg6[%c0_58, %c1_59] : memref<1x2xf32, #tpu.memory_space<smem>>
      memref.store %139, %arg6[%c0_58, %c1_59] : memref<1x2xf32, #tpu.memory_space<smem>>
    } else {
    }
    return
  }
  func.func @transform_0(%arg0: i32) -> (i32, i32, i32) {
    %c0_i32 = arith.constant 0 : i32
    %c0_i32_0 = arith.constant 0 : i32
    %c0_i32_1 = arith.constant 0 : i32
    return %c0_i32, %arg0, %c0_i32_0 : i32, i32, i32
  }
  func.func @transform_1(%arg0: i32) -> (i32, i32) {
    %c0_i32 = arith.constant 0 : i32
    %c0_i32_0 = arith.constant 0 : i32
    return %arg0, %c0_i32 : i32, i32
  }
  func.func @transform_2(%arg0: i32) -> (i32, i32) {
    %c0_i32 = arith.constant 0 : i32
    %c0_i32_0 = arith.constant 0 : i32
    %c0_i32_1 = arith.constant 0 : i32
    return %c0_i32, %c0_i32_0 : i32, i32
  }
  func.func @transform_3(%arg0: i32) -> (i32, i32) {
    %c0_i32 = arith.constant 0 : i32
    %c0_i32_0 = arith.constant 0 : i32
    %c0_i32_1 = arith.constant 0 : i32
    return %c0_i32, %c0_i32_0 : i32, i32
  }
  func.func @transform_4(%arg0: i32) -> (i32, i32) {
    %c0_i32 = arith.constant 0 : i32
    %c0_i32_0 = arith.constant 0 : i32
    %c0_i32_1 = arith.constant 0 : i32
    return %c0_i32, %c0_i32_0 : i32, i32
  }
  func.func @transform_5(%arg0: i32) -> (i32, i32) {
    %c0_i32 = arith.constant 0 : i32
    %c0_i32_0 = arith.constant 0 : i32
    %c0_i32_1 = arith.constant 0 : i32
    return %c0_i32, %c0_i32_0 : i32, i32
  }
}

</mosaic_0001>

<llo_original>
// kernel: smpl_loss.2
$region0: #{smpl_loss.2}
  #allocation0 [shape = 'u32[]', space=smem, size = 0x4, offset = 0x4, fixed_abs, tag = 'smem constant byte address 0x4 - core index']
  #allocation1 [shape = 'u32[144,128]{1,0:T(1,128)}', space=vmem, size = 0x12000, scoped, tag = 'internal scratch']
  #allocation2 [shape = 'f32[8,128]{1,0:T(8,128)}', space=vmem, size = 0x1000, scoped, tag = 'scratch operand']
  #allocation3 [shape = 'u32[2048]{0}', space=vmem, size = 0x2000, scoped, tag = 'scoped memory for smpl_loss.2']
  #allocation4 [shape = 'u32[2048]{0}', space=vmem, size = 0x2000, scoped, tag = 'scoped memory for smpl_loss.2']
  #allocation5 [shape = 'u32[2048]{0}', space=vmem, size = 0x2000, scoped, tag = 'scoped memory for smpl_loss.2']
  #allocation6 [shape = 'u32[2048]{0}', space=vmem, size = 0x2000, scoped, tag = 'scoped memory for smpl_loss.2']
  #allocation7 [shape = 'u32[2048]{0}', space=vmem, size = 0x2000, scoped, tag = 'scoped memory for smpl_loss.2']
  #allocation8 [shape = 'u32[2048]{0}', space=vmem, size = 0x2000, scoped, tag = 'scoped memory for smpl_loss.2']
  #allocation9 [shape = 'u32[2048]{0}', space=vmem, size = 0x2000, scoped, tag = 'scoped memory for smpl_loss.2']
  #allocation10 [shape = 'u32[2048]{0}', space=vmem, size = 0x2000, scoped, tag = 'scoped memory for smpl_loss.2']
  #allocation11 [shape = 'u32[2048]{0}', space=vmem, size = 0x2000, scoped, tag = 'scoped memory for smpl_loss.2']
  #allocation12 [shape = 'u32[2048]{0}', space=vmem, size = 0x2000, scoped, tag = 'scoped memory for smpl_loss.2']
  %s0 = inlined_call_operand.vmem [shape: f32[16,8,128], index: 0, kind: input, shape index: {}]
  %s1 = inlined_call_operand.vmem [shape: f32[8,10], index: 1, kind: input, shape index: {}]
  %s2 = inlined_call_operand.vmem [shape: f32[8,10], index: 2, kind: input, shape index: {}]
  %s3 = inlined_call_operand.vmem [shape: f32[192], index: 3, kind: input, shape index: {}]
  %s4 = inlined_call_operand.<no memory space> [shape: f32[], index: 4, kind: input, shape index: {}]
  %s5 = inlined_call_operand.vmem [shape: f32[8], index: 5, kind: input, shape index: {}]
  %s6 = inlined_call_operand.vmem [shape: f32[1,2], index: 6, kind: output, shape index: {}]
  %s7 = sld [smem:[#allocation0]]
  $region38: #{smpl_loss.2} parent=0
    _
  %s9 = ssub.s32 1, %s7
  %s10 = scalar_select 0, %s9, %s7
  %v11 = vstv %s4
  $region1: #{smpl_loss.2} parent=0
    #allocation13 [shape = 'u8[512]{0}', space=smem, size = 0x200, scoped, tag = 'output window, operand 0, single buffered']
    #allocation14 [shape = 's32[1]{0}', space=sflag, size = 0x4, scoped, tag = 'scoped memory for smpl_loss.2']
    #allocation15 [shape = 'u8[49152]{0}', space=vmem, size = 0xc000, dematerialized = true, scoped, tag = 'FusionAdapter Buffer %fusion.1 = f32[12,8,128]{2,1,0:T(8,128)} fusion(%param_0.20), kind=kLoop, calls=%fused_computation.3.clone, metadata={op_name="jit(smpl_loss)/reshape" stack_frame_id=11}']
    #allocation16 [shape = 'u8[4096]{0}', space=vmem, size = 0x1000, dematerialized = true, scoped, tag = 'FusionAdapter Buffer %fusion.4 = f32[8,128]{1,0:T(8,128)} fusion(%param_3.11, %param_4.13), kind=kLoop, calls=%fused_computation.6.clone, metadata={op_name="jit(smpl_loss)/reshape" stack_frame_id=18}']
    #allocation17 [shape = 'u8[8192]{0}', space=vmem, size = 0x2000, dematerialized = true, scoped, tag = 'FusionAdapter Buffer %fusion.3 = f32[10,8]{1,0:T(8,128)} fusion(%param_2.12), kind=kLoop, calls=%fused_computation.5.clone, metadata={op_name="jit(smpl_loss)/transpose" stack_frame_id=19}']
    #allocation18 [shape = 'u8[8192]{0}', space=vmem, size = 0x2000, dematerialized = true, scoped, tag = 'FusionAdapter Buffer %fusion.2 = f32[10,8]{1,0:T(8,128)} fusion(%param_1.16), kind=kLoop, calls=%fused_computation.4.clone, metadata={op_name="jit(smpl_loss)/transpose" stack_frame_id=20}']
    #allocation19 [shape = 'u8[512]{0}', space=vmem, size = 0x400, dematerialized = true, scoped, tag = 'FusionAdapter Buffer %fusion.6 = f32[1,8]{1,0:T(1,128)} fusion(%param_5.2), kind=kLoop, calls=%fused_computation.9.clone, metadata={op_name="jit(smpl_loss)/reshape" stack_frame_id=21}']
    %12 = vsyncpa [#allocation14], 0
    // Predicated region
    $region2: #{smpl_loss.2} parent=1 // pred_check
      _
    $region3: #{smpl_loss.2} parent=1 // pred_check_branch
      %14 = sbr.rel (0) target = $region5
    $region4: #{smpl_loss.2} parent=1 // pred_region
      _
    $region5: #{smpl_loss.2} parent=1 // pred_fallthru
      _
    // Predicated region
    $region6: #{smpl_loss.2} parent=1 // pred_check
      _
    $region7: #{smpl_loss.2} parent=1 // pred_check_branch
      %16 = sbr.rel (0) target = $region9
    $region8: #{smpl_loss.2} parent=1 // pred_region
      _
    $region9: #{smpl_loss.2} parent=1 // pred_fallthru
      _
    // Predicated region
    $region10: #{smpl_loss.2} parent=1 // pred_check
      _
    $region11: #{smpl_loss.2} parent=1 // pred_check_branch
      %18 = sbr.rel (0) target = $region13
    $region12: #{smpl_loss.2} parent=1 // pred_region
      _
    $region13: #{smpl_loss.2} parent=1 // pred_fallthru
      _
    // Predicated region
    $region14: #{smpl_loss.2} parent=1 // pred_check
      _
    $region15: #{smpl_loss.2} parent=1 // pred_check_branch
      %20 = sbr.rel (0) target = $region17
    $region16: #{smpl_loss.2} parent=1 // pred_region
      _
    $region17: #{smpl_loss.2} parent=1 // pred_fallthru
      _
    // Predicated region
    $region18: #{smpl_loss.2} parent=1 // pred_check
      _
    $region19: #{smpl_loss.2} parent=1 // pred_check_branch
      %22 = sbr.rel (0) target = $region21
    $region20: #{smpl_loss.2} parent=1 // pred_region
      _
    $region21: #{smpl_loss.2} parent=1 // pred_fallthru
      _
    %v23 = vld [vmem:[%s0] sm:$0xff]
    %25 = vst [vmem:[#allocation15] sm:$0xff] %v23
    %s26 = scalar_lea.vmem %s0, 8
    %v27 = vld [vmem:[%s26] sm:$0xff]
    %s28 = scalar_lea.vmem [#allocation15], 8
    %30 = vst [vmem:[%s28] sm:$0xff] %v27
    %s31 = scalar_lea.vmem %s0, 16
    %v32 = vld [vmem:[%s31] sm:$0xff]
    %s33 = scalar_lea.vmem [#allocation15], 16
    %35 = vst [vmem:[%s33] sm:$0xff] %v32
    %s36 = scalar_lea.vmem %s0, 24
    %v37 = vld [vmem:[%s36] sm:$0xff]
    %s38 = scalar_lea.vmem [#allocation15], 24
    %40 = vst [vmem:[%s38] sm:$0xff] %v37
    %s41 = scalar_lea.vmem %s0, 32
    %v42 = vld [vmem:[%s41] sm:$0xff]
    %s43 = scalar_lea.vmem [#allocation15], 32
    %45 = vst [vmem:[%s43] sm:$0xff] %v42
    %s46 = scalar_lea.vmem %s0, 40
    %v47 = vld [vmem:[%s46] sm:$0xff]
    %s48 = scalar_lea.vmem [#allocation15], 40
    %50 = vst [vmem:[%s48] sm:$0xff] %v47
    %s51 = scalar_lea.vmem %s0, 48
    %v52 = vld [vmem:[%s51] sm:$0xff]
    %s53 = scalar_lea.vmem [#allocation15], 48
    %55 = vst [vmem:[%s53] sm:$0xff] %v52
    %s56 = scalar_lea.vmem %s0, 56
    %v57 = vld [vmem:[%s56] sm:$0xff]
    %s58 = scalar_lea.vmem [#allocation15], 56
    %60 = vst [vmem:[%s58] sm:$0xff] %v57
    %s61 = scalar_lea.vmem %s0, 64
    %v62 = vld [vmem:[%s61] sm:$0xff]
    %s63 = scalar_lea.vmem [#allocation15], 64
    %65 = vst [vmem:[%s63] sm:$0xff] %v62
    %s66 = scalar_lea.vmem %s0, 72
    %v67 = vld [vmem:[%s66] sm:$0xff]
    %s68 = scalar_lea.vmem [#allocation15], 72
    %70 = vst [vmem:[%s68] sm:$0xff] %v67
    %s71 = scalar_lea.vmem %s0, 80
    %v72 = vld [vmem:[%s71] sm:$0xff]
    %s73 = scalar_lea.vmem [#allocation15], 80
    %75 = vst [vmem:[%s73] sm:$0xff] %v72
    %s76 = scalar_lea.vmem %s0, 88
    %v77 = vld [vmem:[%s76] sm:$0xff]
    %s78 = scalar_lea.vmem [#allocation15], 88
    %80 = vst [vmem:[%s78] sm:$0xff] %v77
    %v81 = vld [vmem:[%s3] sm:$0x3]
    %v82 = vlaneseq
    %vm84 = vcmp.lt.s32.totalorder %v82, 192
    %v85 = vsel %vm84, %v81, %v11
    %87 = vst [vmem:[#allocation16] sm:$0xff] %v85
    %v88 = vld [vmem:[%s2] sm:$0xff]
    %90 = vst [vmem:[#allocation17] sm:$0xff] %v88
    %s91 = scalar_lea.vmem %s2, 8
    %v92 = vld [vmem:[%s91] sm:$0xff]
    %s93 = scalar_lea.vmem [#allocation17], 8
    %95 = vst [vmem:[%s93] sm:$0xff] %v92
    %v96 = vld [vmem:[%s1] sm:$0xff]
    %98 = vst [vmem:[#allocation18] sm:$0xff] %v96
    %s99 = scalar_lea.vmem %s1, 8
    %v100 = vld [vmem:[%s99] sm:$0xff]
    %s101 = scalar_lea.vmem [#allocation18], 8
    %103 = vst [vmem:[%s101] sm:$0xff] %v100
    %v104 = vld [vmem:[%s5] sm:$0x1]
    %106 = vst [vmem:[#allocation19] sm:$0x1] %v104
    %p107 = scmp.eq.s32.totalorder 0, 0
    // Predicated region
    $region22: #{smpl_loss.2} parent=1 // pred_check
      %p108 = pneg %p107
    $region23: #{smpl_loss.2} parent=1 // pred_check_branch
      %110 = sbr.rel (%p108) target = $region25
    $region24: #{smpl_loss.2} parent=1 // pred_region
      %111 = vst [vmem:[#allocation2] sm:$0xff] 0.0
    $region25: #{smpl_loss.2} parent=1 // pred_fallthru
      _
    %s112 = scalar_lea.vmem [#allocation15], 72
    %v113 = vld [vmem:[%s112] sm:$0xff]
    %s114 = scalar_lea.vmem [#allocation15], 80
    %v115 = vld [vmem:[%s114] sm:$0xff]
    %s116 = scalar_lea.vmem [#allocation15], 88
    %v117 = vld [vmem:[%s116] sm:$0xff]
    %v118 = vadd.f32 %v113, 1e-08
    %v119 = vadd.f32 %v115, 1e-08
    %v120 = vadd.f32 %v117, 1e-08
    %v121 = vmul.f32 %v118, %v118
    %v122 = vmul.f32 %v119, %v119
    %v123 = vadd.f32 %v121, %v122
    %v124 = vmul.f32 %v120, %v120
    %v125 = vadd.f32 %v123, %v124
    %v126 = vrsqrt.pop %v125
    %v127 = vmul.f32 %v125, %v126
    %v128 = vmul.f32 %v127, 0.5
    %v129 = vand.u32 2147483647, %v128
    %vm130 = vcmp.le.f32.partialorder %v129, 0.7853982
    %vm131 = vcmp.lt.s32.totalorder %v128, 0
    %v132 = vand.u32 %v128, 2139095040
    %v133 = vshrl.u32 %v132, 23
    %v134 = vsub.s32 %v133, 127
    %v135 = vand.u32 2147483647, %v128
    %v136 = vand.u32 %v135, 8388607
    %v137 = vor.u32 %v136, 8388608
    %v138 = vsub.s32 0, %v137
    %v139 = vadd.s32 %v134, 1
    %vm140 = vcmp.gt.s32.totalorder %v139, 0
    %v141 = vsel %vm140, %v139, 0
    %v142 = vshrl.u32 %v141, 5
    %v143 = vand.u32 %v141, 31
    %v144 = vsub.s32 32, %v143
    %v145 = vshrl.u32 683565275, %v144
    %v146 = vshll.u32 683565275, %v143
    %v147 = vshrl.u32 2475754826, %v144
    %v148 = vor.u32 %v146, %v147
    %v149 = vshll.u32 2475754826, %v143
    %v150 = vshrl.u32 2131351028, %v144
    %v151 = vor.u32 %v149, %v150
    %v152 = vshll.u32 2131351028, %v143
    %v153 = vshrl.u32 2102212464, %v144
    %v154 = vor.u32 %v152, %v153
    %v155 = vshll.u32 2102212464, %v143
    %v156 = vshrl.u32 920167782, %v144
    %v157 = vor.u32 %v155, %v156
    %v158 = vshll.u32 920167782, %v143
    %v159 = vshrl.u32 1326507024, %v144
    %v160 = vor.u32 %v158, %v159
    %vm161 = vcmp.lt.s32.totalorder %v142, 1
    %vm162 = vcmp.lt.s32.totalorder %v142, 2
    %vm163 = vcmp.lt.s32.totalorder %v142, 3
    %vm164 = vcmp.lt.s32.totalorder %v142, 4
    %v165 = vsel %vm161, %v145, %v148
    %v166 = vsel %vm164, %v154, 2102212464
    %v167 = vsel %vm163, %v151, %v166
    %v168 = vsel %vm162, %v165, %v167
    %v169 = vsel %vm161, %v148, %v151
    %v170 = vsel %vm164, %v157, 920167782
    %v171 = vsel %vm163, %v154, %v170
    %v172 = vsel %vm162, %v169, %v171
    %v173 = vsel %vm161, %v151, %v154
    %v174 = vsel %vm164, %v160, 1326507024
    %v175 = vsel %vm163, %v157, %v174
    %v176 = vsel %vm162, %v173, %v175
    %v177 = vshll.u32 %v137, 8
    %v178 = vmul.u32.u64.compose %v177, %v176
    %v179 = vextract.low.u32 %v178
    %v180 = vextract.high.u32 %v178
    %v181 = vmul.u32.u64.compose %v177, %v172
    %v182 = vextract.low.u32 %v181
    %v183 = vextract.high.u32 %v181
    %v184 = vmul.u32 %v177, %v168
    %v185 = vadd.s32 %v180, %v182
    %vm186 = vc.u32 %v180, %v182
    %v187 = vadd.s32 %v183, 1
    %v188 = vsel %vm186, %v187, %v183
    %v189 = vadd.s32 %v184, %v188
    %v190 = vadd.s32 %v189, 536870912
    %v191 = vshrl.u32 %v190, 30
    %v192 = vshll.u32 %v191, 30
    %v193 = vsub.s32 %v189, %v192
    %vm194 = vcmp.lt.s32.totalorder %v193, 0
    %v195 = vsub.s32 0, %v193
    %v196 = vsel %vm194, %v195, %v193
    %v197 = vclz %v196
    %v198 = vsub.s32 %v197, 2
    %vm199 = vcmp.gt.s32.totalorder 0, %v198
    %v200 = vsel %vm199, 0, %v198
    %v201 = vsub.s32 32, %v200
    %v202 = vshll.u32 %v193, %v200
    %v203 = vshrl.u32 %v185, %v201
    %v204 = vor.u32 %v202, %v203
    %v205 = vsub.s32 4294967266, %v200
    %v206 = vadd.s32 %v205, 127
    %v207 = vshll.u32 %v206, 23
    %v208 = vor.u32 4788187, %v207
    %v209 = vand.u32 2147483647, %v208
    %v211 = vcvt.s32.f32 %v204
    %v212 = vmul.f32 %v211, %v209
    %v213 = vxor.u32 %v212, 2147483648
    %v214 = vsel %vm131, %v213, %v212
    %v215 = vsub.s32 4, %v191
    %v216 = vsel %vm131, %v215, %v191
    %v217 = vsel %vm130, %v128, %v214
    %v218 = vsel %vm130, 0, %v216
    %v219 = vcosq.f32.pop %v217
    %v220 = vsinq.f32.pop %v217
    %vm221 = vweird.f32 %v128
    %v222 = vand.u32 %v218, 3
    %vm223 = vcmp.lt.s32.totalorder %v222, 2
    %vm224 = vcmp.eq.s32.totalorder %v222, 0
    %v225 = vxor.u32 %v220, 2147483648
    %v226 = vsel %vm224, %v219, %v225
    %vm227 = vcmp.eq.s32.totalorder %v222, 2
    %v228 = vxor.u32 %v219, 2147483648
    %v229 = vsel %vm227, %v228, %v220
    %v230 = vsel %vm223, %v226, %v229
    %v231 = vsel %vm221, nan, %v230
    %v232 = vand.u32 2147483647, %v128
    %vm233 = vcmp.le.f32.partialorder %v232, 0.7853982
    %vm234 = vcmp.lt.s32.totalorder %v128, 0
    %v235 = vand.u32 %v128, 2139095040
    %v236 = vshrl.u32 %v235, 23
    %v237 = vsub.s32 %v236, 127
    %v238 = vand.u32 2147483647, %v128
    %v239 = vand.u32 %v238, 8388607
    %v240 = vor.u32 %v239, 8388608
    %v241 = vsub.s32 0, %v240
    %v242 = vadd.s32 %v237, 1
    %vm243 = vcmp.gt.s32.totalorder %v242, 0
    %v244 = vsel %vm243, %v242, 0
    %v245 = vshrl.u32 %v244, 5
    %v246 = vand.u32 %v244, 31
    %v247 = vsub.s32 32, %v246
    %v248 = vshrl.u32 683565275, %v247
    %v249 = vshll.u32 683565275, %v246
    %v250 = vshrl.u32 2475754826, %v247
    %v251 = vor.u32 %v249, %v250
    %v252 = vshll.u32 2475754826, %v246
    %v253 = vshrl.u32 2131351028, %v247
    %v254 = vor.u32 %v252, %v253
    %v255 = vshll.u32 2131351028, %v246
    %v256 = vshrl.u32 2102212464, %v247
    %v257 = vor.u32 %v255, %v256
    %v258 = vshll.u32 2102212464, %v246
    %v259 = vshrl.u32 920167782, %v247
    %v260 = vor.u32 %v258, %v259
    %v261 = vshll.u32 920167782, %v246
    %v262 = vshrl.u32 1326507024, %v247
    %v263 = vor.u32 %v261, %v262
    %vm264 = vcmp.lt.s32.totalorder %v245, 1
    %vm265 = vcmp.lt.s32.totalorder %v245, 2
    %vm266 = vcmp.lt.s32.totalorder %v245, 3
    %vm267 = vcmp.lt.s32.totalorder %v245, 4
    %v268 = vsel %vm264, %v248, %v251
    %v269 = vsel %vm267, %v257, 2102212464
    %v270 = vsel %vm266, %v254, %v269
    %v271 = vsel %vm265, %v268, %v270
    %v272 = vsel %vm264, %v251, %v254
    %v273 = vsel %vm267, %v260, 920167782
    %v274 = vsel %vm266, %v257, %v273
    %v275 = vsel %vm265, %v272, %v274
    %v276 = vsel %vm264, %v254, %v257
    %v277 = vsel %vm267, %v263, 1326507024
    %v278 = vsel %vm266, %v260, %v277
    %v279 = vsel %vm265, %v276, %v278
    %v280 = vshll.u32 %v240, 8
    %v281 = vmul.u32.u64.compose %v280, %v279
    %v282 = vextract.low.u32 %v281
    %v283 = vextract.high.u32 %v281
    %v284 = vmul.u32.u64.compose %v280, %v275
    %v285 = vextract.low.u32 %v284
    %v286 = vextract.high.u32 %v284
    %v287 = vmul.u32 %v280, %v271
    %v288 = vadd.s32 %v283, %v285
    %vm289 = vc.u32 %v283, %v285
    %v290 = vadd.s32 %v286, 1
    %v291 = vsel %vm289, %v290, %v286
    %v292 = vadd.s32 %v287, %v291
    %v293 = vadd.s32 %v292, 536870912
    %v294 = vshrl.u32 %v293, 30
    %v295 = vshll.u32 %v294, 30
    %v296 = vsub.s32 %v292, %v295
    %vm297 = vcmp.lt.s32.totalorder %v296, 0
    %v298 = vsub.s32 0, %v296
    %v299 = vsel %vm297, %v298, %v296
    %v300 = vclz %v299
    %v301 = vsub.s32 %v300, 2
    %vm302 = vcmp.gt.s32.totalorder 0, %v301
    %v303 = vsel %vm302, 0, %v301
    %v304 = vsub.s32 32, %v303
    %v305 = vshll.u32 %v296, %v303
    %v306 = vshrl.u32 %v288, %v304
    %v307 = vor.u32 %v305, %v306
    %v308 = vsub.s32 4294967266, %v303
    %v309 = vadd.s32 %v308, 127
    %v310 = vshll.u32 %v309, 23
    %v311 = vor.u32 4788187, %v310
    %v312 = vand.u32 2147483647, %v311
    %v314 = vcvt.s32.f32 %v307
    %v315 = vmul.f32 %v314, %v312
    %v316 = vxor.u32 %v315, 2147483648
    %v317 = vsel %vm234, %v316, %v315
    %v318 = vsub.s32 4, %v294
    %v319 = vsel %vm234, %v318, %v294
    %v320 = vsel %vm233, %v128, %v317
    %v321 = vsel %vm233, 0, %v319
    %v322 = vcosq.f32.pop %v320
    %v323 = vsinq.f32.pop %v320
    %vm324 = vweird.f32 %v128
    %v325 = vadd.s32 %v321, 3
    %v326 = vand.u32 %v325, 3
    %vm327 = vcmp.lt.s32.totalorder %v326, 2
    %vm328 = vcmp.eq.s32.totalorder %v326, 0
    %v329 = vxor.u32 %v323, 2147483648
    %v330 = vsel %vm328, %v322, %v329
    %vm331 = vcmp.eq.s32.totalorder %v326, 2
    %v332 = vxor.u32 %v322, 2147483648
    %v333 = vsel %vm331, %v332, %v323
    %v334 = vsel %vm327, %v330, %v333
    %v335 = vsel %vm324, nan, %v334
    %v336 = vmul.f32 %v335, %v126
    %v337 = vmul.f32 %v336, %v113
    %v338 = vmul.f32 %v336, %v115
    %v339 = vmul.f32 %v336, %v117
    %v340 = vmul.f32 %v231, %v231
    %v341 = vmul.f32 %v337, %v337
    %v342 = vmul.f32 %v338, %v338
    %v343 = vmul.f32 %v339, %v339
    %v344 = vadd.f32 %v231, %v231
    %v345 = vadd.f32 %v337, %v337
    %v346 = vadd.f32 %v338, %v338
    %v347 = vmul.f32 %v344, %v337
    %v348 = vmul.f32 %v344, %v338
    %v349 = vmul.f32 %v344, %v339
    %v350 = vmul.f32 %v345, %v338
    %v351 = vmul.f32 %v345, %v339
    %v352 = vmul.f32 %v346, %v339
    %v353 = vadd.f32 %v340, %v341
    %v354 = vadd.f32 %v342, %v343
    %v355 = vsub.f32 %v340, %v341
    %v356 = vsub.f32 %v342, %v343
    %v357 = vld [vmem:[#allocation15] sm:$0xff]
    %v358 = vsub.f32 %v353, %v354
    %v359 = vsub.f32 %v357, %v358
    %v360 = vmul.f32 %v359, %v359
    %s361 = scalar_lea.vmem [#allocation15], 8
    %v362 = vld [vmem:[%s361] sm:$0xff]
    %v363 = vsub.f32 %v350, %v349
    %v364 = vsub.f32 %v362, %v363
    %v365 = vmul.f32 %v364, %v364
    %s366 = scalar_lea.vmem [#allocation15], 16
    %v367 = vld [vmem:[%s366] sm:$0xff]
    %v368 = vadd.f32 %v348, %v351
    %v369 = vsub.f32 %v367, %v368
    %v370 = vmul.f32 %v369, %v369
    %s371 = scalar_lea.vmem [#allocation15], 24
    %v372 = vld [vmem:[%s371] sm:$0xff]
    %v373 = vadd.f32 %v349, %v350
    %v374 = vsub.f32 %v372, %v373
    %v375 = vmul.f32 %v374, %v374
    %v376 = vadd.f32 %v360, %v375
    %s377 = scalar_lea.vmem [#allocation15], 32
    %v378 = vld [vmem:[%s377] sm:$0xff]
    %v379 = vadd.f32 %v355, %v356
    %v380 = vsub.f32 %v378, %v379
    %v381 = vmul.f32 %v380, %v380
    %v382 = vadd.f32 %v365, %v381
    %s383 = scalar_lea.vmem [#allocation15], 40
    %v384 = vld [vmem:[%s383] sm:$0xff]
    %v385 = vsub.f32 %v352, %v347
    %v386 = vsub.f32 %v384, %v385
    %v387 = vmul.f32 %v386, %v386
    %v388 = vadd.f32 %v370, %v387
    %s389 = scalar_lea.vmem [#allocation15], 48
    %v390 = vld [vmem:[%s389] sm:$0xff]
    %v391 = vsub.f32 %v351, %v348
    %v392 = vsub.f32 %v390, %v391
    %v393 = vmul.f32 %v392, %v392
    %v394 = vadd.f32 %v376, %v393
    %s395 = scalar_lea.vmem [#allocation15], 56
    %v396 = vld [vmem:[%s395] sm:$0xff]
    %v397 = vadd.f32 %v347, %v352
    %v398 = vsub.f32 %v396, %v397
    %v399 = vmul.f32 %v398, %v398
    %v400 = vadd.f32 %v382, %v399
    %s401 = scalar_lea.vmem [#allocation15], 64
    %v402 = vld [vmem:[%s401] sm:$0xff]
    %v403 = vsub.f32 %v355, %v356
    %v404 = vsub.f32 %v402, %v403
    %v405 = vmul.f32 %v404, %v404
    %v406 = vadd.f32 %v388, %v405
    %v407 = vld [vmem:[#allocation16] sm:$0xff]
    %v408 = vld [vmem:[#allocation2] sm:$0xff]
    %v409 = vadd.f32 %v394, %v400
    %v410 = vadd.f32 %v409, %v406
    %v411 = vmul.f32 %v407, %v410
    %v412 = vadd.f32 %v408, %v411
    %413 = vst [vmem:[#allocation2] sm:$0xff] %v412
    // Predicated region
    $region26: #{smpl_loss.2} parent=1 // pred_check
      %p414 = pneg %p107
    $region27: #{smpl_loss.2} parent=1 // pred_check_branch
      %416 = sbr.rel (%p414) target = $region29
    $region28: #{smpl_loss.2} parent=1 // pred_region
      %v417 = vld [vmem:[#allocation2] sm:$0xff]
      %418 = vadd.xlane.f32.xlu0 %v417
      %v419 = vpop.xlane.xlu0 %418
      %v420 = vrot.slane %v419, 4
      %v421 = vadd.f32 %v419, %v420
      %v422 = vrot.slane %v421, 2
      %v423 = vadd.f32 %v421, %v422
      %v424 = vrot.slane %v423, 1
      %v425 = vadd.f32 %v423, %v424
      %s426 = vtos %v425
      %v427 = vld [vmem:[#allocation19] sm:$0x1]
      %v428 = vld [vmem:[#allocation17] sm:$0xff]
      %v429 = vld [vmem:[#allocation17 + $0x8] sm:$0x3]
      %v430 = vld [vmem:[#allocation18] sm:$0xff]
      %v431 = vld [vmem:[#allocation18 + $0x8] sm:$0x3]
      %v432 = vsub.f32 %v428, %v430
      %v433 = vsub.f32 %v429, %v431
      %v435 = vlaneseq
      %v436 = vshrl.u32 %v435, 7
      %v437 = vsub.s32 0, %v436
      %v438 = vrot.slane %v427, %v437
      %v440 = vmul.f32 %v438, %v432
      %v441 = vmul.f32 %v438, %v433
      %v442 = vmul.f32 %v440, %v432
      %v443 = vmul.f32 %v441, %v433
      %vm444 = vcmask 64512
      %v445 = vsel %vm444, %v442, 0.0
      %vm446 = vcmask 58368
      %v447 = vsel %vm446, %v443, 0.0
      %v448 = vadd.f32 %v445, %v447
      %449 = vadd.xlane.f32.xlu0 %v448
      %v450 = vpop.xlane.xlu0 %449
      %v451 = vrot.slane %v450, 4
      %v452 = vadd.f32 %v450, %v451
      %v453 = vrot.slane %v452, 2
      %v454 = vadd.f32 %v452, %v453
      %v455 = vrot.slane %v454, 1
      %v456 = vadd.f32 %v454, %v455
      %s457 = vtos %v456
      %vm458 = vcmask 57344
      %v459 = vsel %vm458, %v427, 0.0
      %460 = vadd.xlane.f32.xlu0 %v459
      %v461 = vpop.xlane.xlu0 %460
      %v462 = vrot.slane %v461, 4
      %v463 = vadd.f32 %v461, %v462
      %v464 = vrot.slane %v463, 2
      %v465 = vadd.f32 %v463, %v464
      %v466 = vrot.slane %v465, 1
      %v467 = vadd.f32 %v465, %v466
      %s468 = vtos %v467
      %s469 = smax.f32 %s468, 1.0
      %p470 = scmp.gt.f32.partialorder %s468, 0.5
      %s471 = smul.f32 %s469, 216.0
      %v472 = vstv %s471
      %v473 = vrcp.pop %v472
      %s474 = vtos %v473
      %s475 = smul.f32 %s426, %s474
      %s476 = scalar_select %p470, %s475, 0.0
      %s477 = smul.f32 %s469, 10.0
      %v478 = vstv %s477
      %v479 = vrcp.pop %v478
      %s480 = vtos %v479
      %s481 = smul.f32 %s457, %s480
      %s482 = scalar_select %p470, %s481, 0.0
      %s483 = scalar_lea.smem [#allocation13], 0
      %484 = sst [smem:[%s483]] %s476
      %s485 = smul.f32 %s482, 0.001
      %s486 = scalar_lea.smem [#allocation13], 1
      %487 = sst [smem:[%s486]] %s485
    $region29: #{smpl_loss.2} parent=1 // pred_fallthru
      _
    // Predicated region
    $region30: #{smpl_loss.2} parent=1 // pred_check
      _
    $region31: #{smpl_loss.2} parent=1 // pred_check_branch
      %489 = sbr.rel (0) target = $region33
    $region32: #{smpl_loss.2} parent=1 // pred_region
      %s491 = ssub.s32 16, 16
      %492 = vsyncadd [#allocation14], %s491
      %s494 = sshll.u32 %s6, 4
      %s495 = int_to_ptr.vmem [resolvable:$true] %s494
      %497 = dma.smem_to_vmem [#allocation13], 16, %s495, [#allocation14]
    $region33: #{smpl_loss.2} parent=1 // pred_fallthru
      _
    // Predicated region
    $region34: #{smpl_loss.2} parent=1 // pred_check
      _
    $region35: #{smpl_loss.2} parent=1 // pred_check_branch
      %499 = sbr.rel (0) target = $region37
    $region36: #{smpl_loss.2} parent=1 // pred_region
      %500 = dma.done [#allocation14], 16
    $region37: #{smpl_loss.2} parent=1 // pred_fallthru
      _
    %501 = sfence
    %502 = vsyncpa [#allocation14], 1

</llo_original>
